<compile_context>
chip_gen: v7x
topology: tpu7x:2x2x1
jax: 0.10.0
libtpu: 0.0.40
codegen_flags: <defaults>
</compile_context>

<pallas_src>
import functools

import jax
import jax.numpy as jnp
from jax.experimental import pallas as pl
from jax.experimental.pallas import tpu as pltpu


def _round_up(x, m):
    return (x + m - 1) // m * m


def _pad_to(a, shape):
    pads = [(0, s - d) for d, s in zip(a.shape, shape)]
    return jnp.pad(a, pads)


def _actor_kernel(min_log_std, log_std_range, action_dim, feature_dim, compute_dtype,
                  obs_ref, w_trT_ref, vecs_ref, w1_ref, w2_ref, w3_ref,
                  out_ref, acc_ref):
    """Trunk (Linear + LayerNorm + Tanh) -> policy MLP -> [mean | std] block."""
    e = pl.program_id(0)          # encoder axis (reduction)
    k = pl.program_id(1)          # K-tile axis (reduction)

    @pl.when(jnp.logical_and(e == 0, k == 0))
    def _init():
        acc_ref[...] = jnp.zeros_like(acc_ref)

    # ---- trunk partial matmul ----
    # obs tile (B_pad, tk) bf16 and transposed-weight tile (F_w, tk) bf16 both have
    # the reduction axis on lanes; contract lanes of both (A @ B^T) -> (B_pad, F_w)
    # with f32 accumulation on the MXU.  No 128-lane padding of feature_dim needed.
    acc_ref[...] += jax.lax.dot_general(
        obs_ref[...], w_trT_ref[...],
        dimension_numbers=(((1,), (1,)), ((), ())),
        preferred_element_type=jnp.float32)

    @pl.when(jnp.logical_and(e == pl.num_programs(0) - 1,
                             k == pl.num_programs(1) - 1))
    def _finalize():
        f_w = acc_ref.shape[-1]
        h_pad = w2_ref.shape[-1]
        head_pad = out_ref.shape[-1]

        # packed (1, N) vectors — all slices start at lane 0 (no relayout)
        b_tr = vecs_ref[0:1, :f_w]
        g_ln = vecs_ref[1:2, :f_w]
        be_ln = vecs_ref[2:3, :f_w]
        b1 = vecs_ref[3:4, :h_pad]
        b2 = vecs_ref[4:5, :h_pad]
        b3 = vecs_ref[5:6, :head_pad]

        h = acc_ref[...] + b_tr                       # padded feature cols stay 0

        # ---- LayerNorm (eps=1e-5, biased variance) masked to true feature_dim ----
        fcol = jax.lax.broadcasted_iota(jnp.int32, h.shape, 1)
        fmask = fcol < feature_dim
        inv_n = 1.0 / float(feature_dim)
        mu = jnp.sum(h, axis=-1, keepdims=True) * inv_n   # padded cols are zero
        xc = jnp.where(fmask, h - mu, 0.0)
        var = jnp.sum(xc * xc, axis=-1, keepdims=True) * inv_n
        h = xc * jax.lax.rsqrt(var + 1e-5)
        h = jnp.tanh(h * g_ln + be_ln)                # padded cols -> tanh(0) = 0

        # ---- policy MLP (bf16 MXU inputs, f32 accumulation) ----
        h = jnp.dot(h.astype(compute_dtype), w1_ref[...],
                    preferred_element_type=jnp.float32) + b1
        h = jnp.maximum(h, 0.0)
        h = jnp.dot(h.astype(compute_dtype), w2_ref[...],
                    preferred_element_type=jnp.float32) + b2
        h = jnp.maximum(h, 0.0)
        out = jnp.dot(h.astype(compute_dtype), w3_ref[...],
                      preferred_element_type=jnp.float32) + b3

        # ---- head transform (mean_std semantics), lane-dense single output ----
        # cols [0, action_dim) keep the raw mean; cols [action_dim, ...) get
        # std = exp((tanh+1)/2*range + min).  Lane-index select instead of a
        # lane-offset slice -> no XLU relayout, one unmasked output store.
        std = jnp.exp((jnp.tanh(out) + 1.0) * 0.5 * log_std_range + min_log_std)
        acol = jax.lax.broadcasted_iota(jnp.int32, out.shape, 1)
        out_ref[...] = jnp.where(acol < action_dim, out, std)


def prepare_actor_params(params, num_encoders, repr_dim, *, tk=8192,
                         weight_dtype=jnp.bfloat16):
    """One-time parameter preprocessing (hoisted out of the per-call path).

    Transposes/pads/casts the big trunk weight and packs the small vectors.
    Call once and reuse the result for every actor forward call.
    """
    w_tr, b_tr, g_ln, be_ln, w1, b1, w2, b2, w3, b3 = params
    E, D = int(num_encoders), int(repr_dim)
    in_dim, feature_dim = w_tr.shape
    assert in_dim == E * D
    hidden_dim = w1.shape[1]
    action_dim = w3.shape[1] // 2
    assert w3.shape[1] == 2 * action_dim

    # K-tile: biggest requested size that is a multiple of 128 and <= padded D.
    tk = min(int(tk), _round_up(D, 128))
    tk = _round_up(tk, 128)
    D_pad = _round_up(D, tk)

    F_w = _round_up(feature_dim, 16)            # sublane granule only, no 128 pad
    H_pad = _round_up(hidden_dim, 128)
    head_pad = _round_up(2 * action_dim, 128)   # lane-dense output block
    max_n = max(F_w, H_pad, head_pad)

    # trunk weight transposed: huge D axis on lanes, feature_dim on sublanes.
    # (E*D, F) rows are encoder-major contiguous (matches torch.cat over encoders).
    w_trT = jnp.transpose(w_tr.reshape(E, D, feature_dim), (0, 2, 1))
    w_trT = _pad_to(w_trT, (E, F_w, D_pad)).astype(weight_dtype)

    w1_p = _pad_to(w1, (F_w, H_pad)).astype(weight_dtype)
    w2_p = _pad_to(w2, (H_pad, H_pad)).astype(weight_dtype)
    w3_p = _pad_to(w3, (H_pad, head_pad)).astype(weight_dtype)

    # pack all (1, N) vectors into one (8, max_n) block -> one DMA instead of six
    vecs = jnp.zeros((8, max_n), jnp.float32)
    vecs = vecs.at[0, :feature_dim].set(b_tr.reshape(-1))
    vecs = vecs.at[1, :feature_dim].set(g_ln.reshape(-1))
    vecs = vecs.at[2, :feature_dim].set(be_ln.reshape(-1))
    vecs = vecs.at[3, :hidden_dim].set(b1.reshape(-1))
    vecs = vecs.at[4, :hidden_dim].set(b2.reshape(-1))
    vecs = vecs.at[5, :2 * action_dim].set(b3.reshape(-1))

    prepped = (w_trT, vecs, w1_p, w2_p, w3_p)
    meta = dict(E=E, D=D, D_pad=D_pad, tk=tk,
                feature_dim=int(feature_dim), F_w=F_w,
                hidden_dim=int(hidden_dim), H_pad=H_pad,
                action_dim=int(action_dim), head_pad=head_pad,
                max_n=max_n, weight_dtype=weight_dtype)
    return prepped, meta


def stochastic_actor_forward(obs, prepped, *, meta, min_log_std, max_log_std):
    """obs: (E, B, D) float32 (ParallelEncoder output). Returns (mean, std)."""
    E, D = meta["E"], meta["D"]
    assert obs.shape[0] == E and obs.shape[2] == D
    B = obs.shape[1]
    B_pad = _round_up(B, 8)

    tk, D_pad = meta["tk"], meta["D_pad"]
    F_w, H_pad, head_pad = meta["F_w"], meta["H_pad"], meta["head_pad"]
    max_n = meta["max_n"]
    feature_dim = meta["feature_dim"]
    action_dim = meta["action_dim"]
    wdt = meta["weight_dtype"]

    w_trT, vecs, w1_p, w2_p, w3_p = prepped

    # obs stays encoder-major (E, B, D): the transpose is fused into the grid.
    # Stream it in bf16 (it would be cast to bf16 for the MXU anyway).
    obs_p = _pad_to(obs.astype(wdt), (E, B_pad, D_pad))

    kernel = functools.partial(
        _actor_kernel, float(min_log_std), float(max_log_std - min_log_std),
        action_dim, feature_dim, wdt)

    grid = (E, D_pad // tk)
    out = pl.pallas_call(
        kernel,
        out_shape=jax.ShapeDtypeStruct((B_pad, head_pad), jnp.float32),
        grid_spec=pltpu.PrefetchScalarGridSpec(
            num_scalar_prefetch=0,
            grid=grid,
            in_specs=[
                # trunk inputs stream through the reduction grid
                # (default double-buffered pipelining).
                pl.BlockSpec((None, B_pad, tk), lambda e, k: (e, 0, k)),
                pl.BlockSpec((None, F_w, tk), lambda e, k: (e, 0, k)),
                # small tensors stay resident (constant block index)
                pl.BlockSpec((8, max_n), lambda e, k: (0, 0)),
                pl.BlockSpec((F_w, H_pad), lambda e, k: (0, 0)),
                pl.BlockSpec((H_pad, H_pad), lambda e, k: (0, 0)),
                pl.BlockSpec((H_pad, head_pad), lambda e, k: (0, 0)),
            ],
            out_specs=pl.BlockSpec((B_pad, head_pad), lambda e, k: (0, 0)),
            scratch_shapes=[pltpu.VMEM((B_pad, F_w), jnp.float32)],
        ),
        compiler_params=pltpu.CompilerParams(
            # both grid axes are reductions into the same output block
            dimension_semantics=("arbitrary", "arbitrary"),
            vmem_limit_bytes=32 * 1024 * 1024,   # fits v7x's 64 MiB physical VMEM
        ),
    )(obs_p, w_trT, vecs, w1_p, w2_p, w3_p)

    mean = out[:B, :action_dim]
    std = out[:B, action_dim:2 * action_dim]
    return mean, std


def init_params(key, in_dim, feature_dim, hidden_dim, action_dim):
    """Deterministic synthetic init (stand-in for utils.weight_init), f32."""
    ks = jax.random.split(key, 5)

    def linear(k, fan_in, fan_out):
        scale = 1.0 / jnp.sqrt(jnp.asarray(fan_in, jnp.float32))
        w = jax.random.normal(k, (fan_in, fan_out), jnp.float32) * scale
        b = jnp.zeros((fan_out,), jnp.float32)
        return w, b

    w_tr, b_tr = linear(ks[0], in_dim, feature_dim)
    g_ln = jnp.ones((feature_dim,), jnp.float32)       # LayerNorm weight
    be_ln = jnp.zeros((feature_dim,), jnp.float32)     # LayerNorm bias
    w1, b1 = linear(ks[1], feature_dim, hidden_dim)
    w2, b2 = linear(ks[2], hidden_dim, hidden_dim)
    w3, b3 = linear(ks[3], hidden_dim, 2 * action_dim)
    return (w_tr, b_tr, g_ln, be_ln, w1, b1, w2, b2, w3, b3)


def reference_forward(obs, params, *, action_dim, min_log_std, max_log_std,
                      weight_dtype=jnp.bfloat16):
    """Pure-JAX reference emulating the kernel's mixed precision (bf16 matmul
    inputs, f32 accumulation / elementwise math)."""
    E, B, D = obs.shape
    w_tr, b_tr, g_ln, be_ln, w1, b1, w2, b2, w3, b3 = params
    rd = lambda a: a.astype(weight_dtype).astype(jnp.float32)
    x = jnp.transpose(obs, (1, 0, 2)).reshape(B, E * D)
    h = rd(x) @ rd(w_tr) + b_tr[None, :]
    mu = jnp.mean(h, axis=-1, keepdims=True)
    xc = h - mu
    var = jnp.mean(xc * xc, axis=-1, keepdims=True)
    h = xc * jax.lax.rsqrt(var + 1e-5) * g_ln[None, :] + be_ln[None, :]
    h = jnp.tanh(h)
    h = jnp.maximum(rd(h) @ rd(w1) + b1[None, :], 0.0)
    h = jnp.maximum(rd(h) @ rd(w2) + b2[None, :], 0.0)
    out = rd(h) @ rd(w3) + b3[None, :]
    mean, log_std = out[:, :action_dim], out[:, action_dim:]
    log_std = (jnp.tanh(log_std) + 1.0) * 0.5 * (max_log_std - min_log_std) + min_log_std
    return mean, jnp.exp(log_std)


if __name__ == "__main__":
    # Small shapes consistent with the module:
    #   num_encoders E=2, batch B=8, per-encoder repr_dim D=128 (synthetic,
    #   stands in for num_filters*35*35), feature_dim=50, hidden_dim=256,
    #   action_dim=6, log_std range [-10, 2].
    E, B, D = 2, 8, 128
    feature_dim, hidden_dim, action_dim = 50, 256, 6
    min_log_std, max_log_std = -10.0, 2.0

    key = jax.random.PRNGKey(0)
    k_obs, k_par = jax.random.split(key)
    obs = jax.random.normal(k_obs, (E, B, D), jnp.float32)
    params = init_params(k_par, E * D, feature_dim, hidden_dim, action_dim)

    # one-time preprocessing (hoisted out of the per-call path)
    prepped, meta = prepare_actor_params(params, E, D, tk=8192)
    prepped = jax.block_until_ready(prepped)

    fwd = jax.jit(functools.partial(
        stochastic_actor_forward, meta=meta,
        min_log_std=min_log_std, max_log_std=max_log_std))

    mean, std = fwd(obs, prepped)
    jax.block_until_ready((mean, std))

    mean_ref, std_ref = reference_forward(
        obs, params, action_dim=action_dim,
        min_log_std=min_log_std, max_log_std=max_log_std)

    assert mean.shape == (B, action_dim) and std.shape == (B, action_dim)
    assert bool(jnp.all(std > 0.0))
    assert bool(jnp.allclose(mean, mean_ref, rtol=1e-2, atol=1e-2))
    assert bool(jnp.allclose(std, std_ref, rtol=1e-2, atol=1e-2))
    print("KERNEL_OK")
</pallas_src>

<mosaic_0001>
module attributes {stable_mosaic.version = 11 : i64} {
  func.func @_actor_kernel(%arg0: i32, %arg1: i32, %arg2: memref<1x8x128xbf16, #tpu.memory_space<vmem>>, %arg3: memref<1x64x128xbf16, #tpu.memory_space<vmem>>, %arg4: memref<8x256xf32, #tpu.memory_space<vmem>>, %arg5: memref<64x256xbf16, #tpu.memory_space<vmem>>, %arg6: memref<256x256xbf16, #tpu.memory_space<vmem>>, %arg7: memref<256x128xbf16, #tpu.memory_space<vmem>>, %arg8: memref<8x128xf32, #tpu.memory_space<vmem>>, %arg9: memref<8x64xf32, #tpu.memory_space<vmem>>) attributes {dimension_semantics = [#tpu.dimension_semantics<arbitrary>, #tpu.dimension_semantics<arbitrary>], iteration_bounds = array<i64: 2, 1>, scalar_prefetch = 0 : i64, scratch_operands = 1 : i64, tpu.core_type = #tpu.core_type<tc>, window_params = [{transform_indices = @transform_0, window_bounds = array<i64: 1, 8, 128>}, {transform_indices = @transform_1, window_bounds = array<i64: 1, 64, 128>}, {pipeline_mode = #tpu.pipeline_mode<synchronous>, transform_indices = @transform_2, window_bounds = array<i64: 8, 256>}, {pipeline_mode = #tpu.pipeline_mode<synchronous>, transform_indices = @transform_3, window_bounds = array<i64: 64, 256>}, {pipeline_mode = #tpu.pipeline_mode<synchronous>, transform_indices = @transform_4, window_bounds = array<i64: 256, 256>}, {pipeline_mode = #tpu.pipeline_mode<synchronous>, transform_indices = @transform_5, window_bounds = array<i64: 256, 128>}, {pipeline_mode = #tpu.pipeline_mode<synchronous>, transform_indices = @transform_6, window_bounds = array<i64: 8, 128>}]} {
    %c0_i32 = arith.constant 0 : i32
    %0 = arith.cmpi eq, %arg0, %c0_i32 : i32
    %c0_i32_0 = arith.constant 0 : i32
    %1 = arith.cmpi eq, %arg1, %c0_i32_0 : i32
    %2 = arith.andi %0, %1 : i1
    %3 = arith.extui %2 : i1 to i32
    %c0_i32_1 = arith.constant 0 : i32
    %4 = arith.cmpi ne, %3, %c0_i32_1 : i32
    scf.if %4 {
      %cst_13 = arith.constant 0.000000e+00 : f32
      %18 = vector.broadcast %cst_13 : f32 to vector<8x64xf32>
      %c0_14 = arith.constant 0 : index
      %c0_15 = arith.constant 0 : index
      %19 = vector.load %arg9[%c0_14, %c0_15] : memref<8x64xf32, #tpu.memory_space<vmem>>, vector<8x64xf32>
      tpu.vector_store %arg9[%c0_14, %c0_15], %18 {strides = array<i32>} : memref<8x64xf32, #tpu.memory_space<vmem>>, vector<8x64xf32>,
    } else {
    }
    %c0 = arith.constant 0 : index
    %c0_2 = arith.constant 0 : index
    %5 = vector.load %arg9[%c0, %c0_2] : memref<8x64xf32, #tpu.memory_space<vmem>>, vector<8x64xf32>
    %c0_3 = arith.constant 0 : index
    %c0_4 = arith.constant 0 : index
    %c0_5 = arith.constant 0 : index
    %6 = vector.load %arg2[%c0_3, %c0_4, %c0_5] : memref<1x8x128xbf16, #tpu.memory_space<vmem>>, vector<1x8x128xbf16>
    %7 = vector.shape_cast %6 : vector<1x8x128xbf16> to vector<8x128xbf16>
    %c0_6 = arith.constant 0 : index
    %c0_7 = arith.constant 0 : index
    %c0_8 = arith.constant 0 : index
    %8 = vector.load %arg3[%c0_6, %c0_7, %c0_8] : memref<1x64x128xbf16, #tpu.memory_space<vmem>>, vector<1x64x128xbf16>
    %9 = vector.shape_cast %8 : vector<1x64x128xbf16> to vector<64x128xbf16>
    %cst = arith.constant dense<0.000000e+00> : vector<8x64xf32>
    %10 = tpu.matmul %7, %9, %cst {dimension_numbers = #tpu.dot_dimension_numbers<[1], [1], [0], [0], [0, 0, 1, 0], [], []>} : vector<8x128xbf16>, vector<64x128xbf16>, vector<8x64xf32> -> vector<8x64xf32>
    %11 = arith.addf %5, %10 : vector<8x64xf32>
    %c0_9 = arith.constant 0 : index
    %c0_10 = arith.constant 0 : index
    %12 = vector.load %arg9[%c0_9, %c0_10] : memref<8x64xf32, #tpu.memory_space<vmem>>, vector<8x64xf32>
    tpu.vector_store %arg9[%c0_9, %c0_10], %11 {strides = array<i32>} : memref<8x64xf32, #tpu.memory_space<vmem>>, vector<8x64xf32>,
    %c1_i32 = arith.constant 1 : i32
    %13 = arith.cmpi eq, %arg0, %c1_i32 : i32
    %c0_i32_11 = arith.constant 0 : i32
    %14 = arith.cmpi eq, %arg1, %c0_i32_11 : i32
    %15 = arith.andi %13, %14 : i1
    %16 = arith.extui %15 : i1 to i32
    %c0_i32_12 = arith.constant 0 : i32
    %17 = arith.cmpi ne, %16, %c0_i32_12 : i32
    scf.if %17 {
      %c0_13 = arith.constant 0 : index
      %c0_14 = arith.constant 0 : index
      %18 = vector.load %arg4[%c0_13, %c0_14] : memref<8x256xf32, #tpu.memory_space<vmem>>, vector<1x64xf32>
      %c1 = arith.constant 1 : index
      %c0_15 = arith.constant 0 : index
      %19 = vector.load %arg4[%c1, %c0_15] : memref<8x256xf32, #tpu.memory_space<vmem>>, vector<1x64xf32>
      %c2 = arith.constant 2 : index
      %c0_16 = arith.constant 0 : index
      %20 = vector.load %arg4[%c2, %c0_16] : memref<8x256xf32, #tpu.memory_space<vmem>>, vector<1x64xf32>
      %c3 = arith.constant 3 : index
      %c0_17 = arith.constant 0 : index
      %21 = vector.load %arg4[%c3, %c0_17] : memref<8x256xf32, #tpu.memory_space<vmem>>, vector<1x256xf32>
      %c4 = arith.constant 4 : index
      %c0_18 = arith.constant 0 : index
      %22 = vector.load %arg4[%c4, %c0_18] : memref<8x256xf32, #tpu.memory_space<vmem>>, vector<1x256xf32>
      %c5 = arith.constant 5 : index
      %c0_19 = arith.constant 0 : index
      %23 = vector.load %arg4[%c5, %c0_19] : memref<8x256xf32, #tpu.memory_space<vmem>>, vector<1x128xf32>
      %c0_20 = arith.constant 0 : index
      %c0_21 = arith.constant 0 : index
      %24 = vector.load %arg9[%c0_20, %c0_21] : memref<8x64xf32, #tpu.memory_space<vmem>>, vector<8x64xf32>
      %25 = vector.broadcast %18 : vector<1x64xf32> to vector<8x64xf32>
      %26 = arith.addf %24, %25 : vector<8x64xf32>
      %27 = tpu.iota {dimensions = array<i32: 1>} : vector<8x64xi32>
      %c50_i32 = arith.constant 50 : i32
      %28 = vector.broadcast %c50_i32 : i32 to vector<8x64xi32>
      %29 = arith.cmpi slt, %27, %28 : vector<8x64xi32>
      %cst_22 = arith.constant dense<0.000000e+00> : vector<8xf32>
      %30 = vector.multi_reduction <add>, %26, %cst_22 [1] : vector<8x64xf32> to vector<8xf32>
      %31 = vector.shape_cast %30 : vector<8xf32> to vector<8x1xf32>
      %cst_23 = arith.constant 2.000000e-02 : f32
      %32 = vector.broadcast %cst_23 : f32 to vector<8x1xf32>
      %33 = arith.mulf %31, %32 : vector<8x1xf32>
      %34 = vector.broadcast %33 : vector<8x1xf32> to vector<8x64xf32>
      %35 = arith.subf %26, %34 : vector<8x64xf32>
      %cst_24 = arith.constant 0.000000e+00 : f32
      %36 = vector.broadcast %cst_24 : f32 to vector<8x64xf32>
      %37 = arith.select %29, %35, %36 : vector<8x64xi1>, vector<8x64xf32>
      %38 = arith.mulf %37, %37 : vector<8x64xf32>
      %cst_25 = arith.constant dense<0.000000e+00> : vector<8xf32>
      %39 = vector.multi_reduction <add>, %38, %cst_25 [1] : vector<8x64xf32> to vector<8xf32>
      %40 = vector.shape_cast %39 : vector<8xf32> to vector<8x1xf32>
      %cst_26 = arith.constant 2.000000e-02 : f32
      %41 = vector.broadcast %cst_26 : f32 to vector<8x1xf32>
      %42 = arith.mulf %40, %41 : vector<8x1xf32>
      %cst_27 = arith.constant 9.99999974E-6 : f32
      %43 = vector.broadcast %cst_27 : f32 to vector<8x1xf32>
      %44 = arith.addf %42, %43 : vector<8x1xf32>
      %45 = math.rsqrt %44 : vector<8x1xf32>
      %46 = vector.broadcast %45 : vector<8x1xf32> to vector<8x64xf32>
      %47 = arith.mulf %37, %46 : vector<8x64xf32>
      %48 = vector.broadcast %19 : vector<1x64xf32> to vector<8x64xf32>
      %49 = arith.mulf %47, %48 : vector<8x64xf32>
      %50 = vector.broadcast %20 : vector<1x64xf32> to vector<8x64xf32>
      %51 = arith.addf %49, %50 : vector<8x64xf32>
      %52 = math.tanh %51 : vector<8x64xf32>
      %53 = arith.truncf %52 : vector<8x64xf32> to vector<8x64xbf16>
      %c0_28 = arith.constant 0 : index
      %c0_29 = arith.constant 0 : index
      %54 = vector.load %arg5[%c0_28, %c0_29] : memref<64x256xbf16, #tpu.memory_space<vmem>>, vector<64x256xbf16>
      %cst_30 = arith.constant dense<0.000000e+00> : vector<8x256xf32>
      %55 = tpu.matmul %53, %54, %cst_30 {dimension_numbers = #tpu.dot_dimension_numbers<[1], [0], [0], [1], [0, 0, 1, 1], [], []>} : vector<8x64xbf16>, vector<64x256xbf16>, vector<8x256xf32> -> vector<8x256xf32>
      %56 = vector.broadcast %21 : vector<1x256xf32> to vector<8x256xf32>
      %57 = arith.addf %55, %56 : vector<8x256xf32>
      %cst_31 = arith.constant 0.000000e+00 : f32
      %58 = vector.broadcast %cst_31 : f32 to vector<8x256xf32>
      %59 = arith.maximumf %57, %58 : vector<8x256xf32>
      %60 = arith.truncf %59 : vector<8x256xf32> to vector<8x256xbf16>
      %c0_32 = arith.constant 0 : index
      %c0_33 = arith.constant 0 : index
      %61 = vector.load %arg6[%c0_32, %c0_33] : memref<256x256xbf16, #tpu.memory_space<vmem>>, vector<256x256xbf16>
      %cst_34 = arith.constant dense<0.000000e+00> : vector<8x256xf32>
      %62 = tpu.matmul %60, %61, %cst_34 {dimension_numbers = #tpu.dot_dimension_numbers<[1], [0], [0], [1], [0, 0, 1, 1], [], []>} : vector<8x256xbf16>, vector<256x256xbf16>, vector<8x256xf32> -> vector<8x256xf32>
      %63 = vector.broadcast %22 : vector<1x256xf32> to vector<8x256xf32>
      %64 = arith.addf %62, %63 : vector<8x256xf32>
      %cst_35 = arith.constant 0.000000e+00 : f32
      %65 = vector.broadcast %cst_35 : f32 to vector<8x256xf32>
      %66 = arith.maximumf %64, %65 : vector<8x256xf32>
      %67 = arith.truncf %66 : vector<8x256xf32> to vector<8x256xbf16>
      %c0_36 = arith.constant 0 : index
      %c0_37 = arith.constant 0 : index
      %68 = vector.load %arg7[%c0_36, %c0_37] : memref<256x128xbf16, #tpu.memory_space<vmem>>, vector<256x128xbf16>
      %cst_38 = arith.constant dense<0.000000e+00> : vector<8x128xf32>
      %69 = tpu.matmul %67, %68, %cst_38 {dimension_numbers = #tpu.dot_dimension_numbers<[1], [0], [0], [1], [0, 0, 1, 1], [], []>} : vector<8x256xbf16>, vector<256x128xbf16>, vector<8x128xf32> -> vector<8x128xf32>
      %70 = vector.broadcast %23 : vector<1x128xf32> to vector<8x128xf32>
      %71 = arith.addf %69, %70 : vector<8x128xf32>
      %72 = math.tanh %71 : vector<8x128xf32>
      %cst_39 = arith.constant 1.000000e+00 : f32
      %73 = vector.broadcast %cst_39 : f32 to vector<8x128xf32>
      %74 = arith.addf %72, %73 : vector<8x128xf32>
      %cst_40 = arith.constant 5.000000e-01 : f32
      %75 = vector.broadcast %cst_40 : f32 to vector<8x128xf32>
      %76 = arith.mulf %74, %75 : vector<8x128xf32>
      %cst_41 = arith.constant 1.200000e+01 : f32
      %77 = vector.broadcast %cst_41 : f32 to vector<8x128xf32>
      %78 = arith.mulf %76, %77 : vector<8x128xf32>
      %cst_42 = arith.constant -1.000000e+01 : f32
      %79 = vector.broadcast %cst_42 : f32 to vector<8x128xf32>
      %80 = arith.addf %78, %79 : vector<8x128xf32>
      %81 = math.exp %80 : vector<8x128xf32>
      %82 = tpu.iota {dimensions = array<i32: 1>} : vector<8x128xi32>
      %c6_i32 = arith.constant 6 : i32
      %83 = vector.broadcast %c6_i32 : i32 to vector<8x128xi32>
      %84 = arith.cmpi slt, %82, %83 : vector<8x128xi32>
      %85 = arith.select %84, %71, %81 : vector<8x128xi1>, vector<8x128xf32>
      %c0_43 = arith.constant 0 : index
      %c0_44 = arith.constant 0 : index
      %86 = vector.load %arg8[%c0_43, %c0_44] : memref<8x128xf32, #tpu.memory_space<vmem>>, vector<8x128xf32>
      tpu.vector_store %arg8[%c0_43, %c0_44], %85 {strides = array<i32>} : memref<8x128xf32, #tpu.memory_space<vmem>>, vector<8x128xf32>,
    } else {
    }
    return
  }
  func.func @transform_0(%arg0: i32, %arg1: i32) -> (i32, i32, i32) {
    %c0_i32 = arith.constant 0 : i32
    %c0_i32_0 = arith.constant 0 : i32
    return %arg0, %c0_i32, %arg1 : i32, i32, i32
  }
  func.func @transform_1(%arg0: i32, %arg1: i32) -> (i32, i32, i32) {
    %c0_i32 = arith.constant 0 : i32
    %c0_i32_0 = arith.constant 0 : i32
    return %arg0, %c0_i32, %arg1 : i32, i32, i32
  }
  func.func @transform_2(%arg0: i32, %arg1: i32) -> (i32, i32) {
    %c0_i32 = arith.constant 0 : i32
    %c0_i32_0 = arith.constant 0 : i32
    %c0_i32_1 = arith.constant 0 : i32
    return %c0_i32, %c0_i32_0 : i32, i32
  }
  func.func @transform_3(%arg0: i32, %arg1: i32) -> (i32, i32) {
    %c0_i32 = arith.constant 0 : i32
    %c0_i32_0 = arith.constant 0 : i32
    %c0_i32_1 = arith.constant 0 : i32
    return %c0_i32, %c0_i32_0 : i32, i32
  }
  func.func @transform_4(%arg0: i32, %arg1: i32) -> (i32, i32) {
    %c0_i32 = arith.constant 0 : i32
    %c0_i32_0 = arith.constant 0 : i32
    %c0_i32_1 = arith.constant 0 : i32
    return %c0_i32, %c0_i32_0 : i32, i32
  }
  func.func @transform_5(%arg0: i32, %arg1: i32) -> (i32, i32) {
    %c0_i32 = arith.constant 0 : i32
    %c0_i32_0 = arith.constant 0 : i32
    %c0_i32_1 = arith.constant 0 : i32
    return %c0_i32, %c0_i32_0 : i32, i32
  }
  func.func @transform_6(%arg0: i32, %arg1: i32) -> (i32, i32) {
    %c0_i32 = arith.constant 0 : i32
    %c0_i32_0 = arith.constant 0 : i32
    %c0_i32_1 = arith.constant 0 : i32
    return %c0_i32, %c0_i32_0 : i32, i32
  }
}

</mosaic_0001>

<llo_original>
// kernel: stochastic_actor_forward.1
$region0: #{stochastic_actor_forward.1}
  #allocation0 [shape = 'u32[]', space=smem, size = 0x4, offset = 0x4, fixed_abs, tag = 'smem constant byte address 0x4 - core index']
  #allocation1 [shape = 'u32[144,128]{1,0:T(1,128)}', space=vmem, size = 0x12000, scoped, tag = 'internal scratch']
  #allocation2 [shape = 'f32[8,64]{1,0:T(8,128)}', space=vmem, size = 0x1000, scoped, tag = 'scratch operand']
  %s0 = inlined_call_operand.vmem [shape: bf16[2,8,128], index: 0, kind: input, shape index: {}]
  %s1 = inlined_call_operand.hbm [shape: bf16[2,64,128], index: 1, kind: input, shape index: {}]
  %s2 = inlined_call_operand.vmem [shape: f32[8,256], index: 2, kind: input, shape index: {}]
  %s3 = inlined_call_operand.hbm [shape: bf16[64,256], index: 3, kind: input, shape index: {}]
  %s4 = inlined_call_operand.hbm [shape: bf16[256,256], index: 4, kind: input, shape index: {}]
  %s5 = inlined_call_operand.hbm [shape: bf16[256,128], index: 5, kind: input, shape index: {}]
  %s6 = inlined_call_operand.vmem [shape: f32[8,128], index: 6, kind: output, shape index: {}]
  %s7 = sld [smem:[#allocation0]]
  $region81: #{stochastic_actor_forward.1} parent=0
    _
  %s9 = ssub.s32 1, %s7
  %s10 = scalar_select 0, %s9, %s7
  $region1: #{stochastic_actor_forward.1} parent=0
    #allocation3 [shape = 'u8[32768]{0}', space=vmem, size = 0x8000, scoped, tag = 'input window, operand 1']
    #allocation4 [shape = 's32[2]{0}', space=sflag, size = 0x8, scoped, tag = 'scoped memory for stochastic_actor_forward.1']
    #allocation5 [shape = 'u8[32768]{0}', space=vmem, size = 0x8000, scoped, tag = 'input window, operand 3, single buffered']
    #allocation6 [shape = 's32[1]{0}', space=sflag, size = 0x4, scoped, tag = 'scoped memory for stochastic_actor_forward.1']
    #allocation7 [shape = 'u8[131072]{0}', space=vmem, size = 0x20000, scoped, tag = 'input window, operand 4, single buffered']
    #allocation8 [shape = 'u8[65536]{0}', space=vmem, size = 0x10000, scoped, tag = 'input window, operand 5, single buffered']
    #allocation9 [shape = 's32[1]{0}', space=sflag, size = 0x4, scoped, tag = 'scoped memory for stochastic_actor_forward.1']
    %11 = vsyncpa [#allocation4], 0
    %s12 = scalar_lea.sflag [#allocation4], 1
    %13 = vsyncpa %s12, 0
    %14 = vsyncpa [#allocation6], 0
    %15 = vsyncpa [#allocation9], 0
    loop: start=0, step=1, limit=4
    $region2: #{stochastic_actor_forward.1} parent=1 // loop_pre_header
      _
    $region3: #{stochastic_actor_forward.1} parent=1 // loop_header
      %s17 = sphi 0, %s21
      %p18 = scmp.ge.s32.totalorder %s17, 4
      %s24 = sphi 0, %s36
      %s25 = sphi 0, %s32
      %s26 = sphi 0, %s24
      %s27 = sphi 0, %s25
      %s28 = sphi 0, %s26
      %s29 = sphi 0, %s27
      %s41 = sphi 0, %s43
      %s44 = sphi 0, %s41
      %s45 = sphi 0, %s44
      %s61 = sphi 0, %s45
      %s69 = sphi 0, %s71
      %s72 = sphi 0, %s69
      %s73 = sphi 0, %s72
      %s89 = sphi 0, %s73
      %s93 = sphi 0, %s93
      %s95 = sphi 0, %s93
      %s96 = sphi 0, %s95
      %s110 = sphi 0, %s96
      %s114 = sphi 0, %s114
      %s116 = sphi 0, %s114
      %s117 = sphi 0, %s116
      %s131 = sphi 0, %s117
      %s135 = sphi 0, %s135
      %s137 = sphi 0, %s135
      %s138 = sphi 0, %s137
      %s152 = sphi 0, %s138
      %s156 = sphi 0, %s156
      %s158 = sphi 0, %s156
      %s159 = sphi 0, %s158
      %s173 = sphi 0, %s159
      %s177 = sphi 0, %s177
      %s179 = sphi 0, %s177
      %s180 = sphi 0, %s179
      %s194 = sphi 0, %s180
    $region4: #{stochastic_actor_forward.1} parent=1 // loop_header_branch
      %20 = sbr.rel (%p18) target = $region8
    $region5: #{stochastic_actor_forward.1} parent=1 // loop_body
      %s22 = ssub.s32 %s17, 1
      %s23 = ssub.s32 %s17, 2
      %s30 = sadd.s32 1, %s25
      %p31 = scmp.ge.s32.totalorder %s30, 1
      %s32 = scalar_select %p31, 0, %s30
      %s33 = sadd.s32 1, %s24
      %s34 = scalar_select %p31, %s33, %s24
      %p35 = scmp.ge.s32.totalorder %s34, 2
      %s36 = scalar_select %p35, 0, %s34
      %s37 = ssub.s32 %s24, %s36
      %s38 = ssub.s32 %s25, %s32
      %s39 = sor.u32 %s37, %s38
      %p40 = scmp.eq.s32.totalorder %s39, 0
      %s42 = sadd.s32 %s41, 1
      %s43 = scalar_select %p40, %s41, %s42
      %p46 = pneg %p40
      %p47 = scmp.eq.s32.totalorder %s17, 1
      %p48 = por %p46, %p47
      %p49 = scmp.ne.s32.totalorder %s41, %s44
      %p50 = scmp.eq.s32.totalorder %s17, 0
      %p51 = por %p49, %p50
      %p52 = scmp.ne.s32.totalorder %s41, %s44
      %p53 = scmp.eq.s32.totalorder %s22, 1
      %p54 = por %p52, %p53
      %p55 = scmp.ne.s32.totalorder %s44, %s45
      %p56 = scmp.eq.s32.totalorder %s22, 0
      %p57 = por %p55, %p56
      %p58 = scmp.ne.s32.totalorder %s44, %s45
      %p59 = scmp.eq.s32.totalorder %s23, 1
      %p60 = por %p58, %p59
      %p62 = scmp.ne.s32.totalorder %s45, %s61
      %p63 = scmp.eq.s32.totalorder %s23, 0
      %p64 = por %p62, %p63
      %s65 = ssub.s32 %s24, %s36
      %s66 = ssub.s32 %s25, %s32
      %s67 = sor.u32 %s65, %s66
      %p68 = scmp.eq.s32.totalorder %s67, 0
      %s70 = sadd.s32 %s69, 1
      %s71 = scalar_select %p68, %s69, %s70
      %p74 = pneg %p68
      %p75 = scmp.eq.s32.totalorder %s17, 1
      %p76 = por %p74, %p75
      %p77 = scmp.ne.s32.totalorder %s69, %s72
      %p78 = scmp.eq.s32.totalorder %s17, 0
      %p79 = por %p77, %p78
      %p80 = scmp.ne.s32.totalorder %s69, %s72
      %p81 = scmp.eq.s32.totalorder %s22, 1
      %p82 = por %p80, %p81
      %p83 = scmp.ne.s32.totalorder %s72, %s73
      %p84 = scmp.eq.s32.totalorder %s22, 0
      %p85 = por %p83, %p84
      %p86 = scmp.ne.s32.totalorder %s72, %s73
      %p87 = scmp.eq.s32.totalorder %s23, 1
      %p88 = por %p86, %p87
      %p90 = scmp.ne.s32.totalorder %s73, %s89
      %p91 = scmp.eq.s32.totalorder %s23, 0
      %p92 = por %p90, %p91
      %s94 = sadd.s32 %s93, 1
      %p97 = scmp.eq.s32.totalorder %s17, 1
      %p98 = scmp.ne.s32.totalorder %s93, %s95
      %p99 = scmp.eq.s32.totalorder %s17, 0
      %p100 = por %p98, %p99
      %p101 = scmp.ne.s32.totalorder %s93, %s95
      %p102 = scmp.eq.s32.totalorder %s22, 1
      %p103 = por %p101, %p102
      %p104 = scmp.ne.s32.totalorder %s95, %s96
      %p105 = scmp.eq.s32.totalorder %s22, 0
      %p106 = por %p104, %p105
      %p107 = scmp.ne.s32.totalorder %s95, %s96
      %p108 = scmp.eq.s32.totalorder %s23, 1
      %p109 = por %p107, %p108
      %p111 = scmp.ne.s32.totalorder %s96, %s110
      %p112 = scmp.eq.s32.totalorder %s23, 0
      %p113 = por %p111, %p112
      %s115 = sadd.s32 %s114, 1
      %p118 = scmp.eq.s32.totalorder %s17, 1
      %p119 = scmp.ne.s32.totalorder %s114, %s116
      %p120 = scmp.eq.s32.totalorder %s17, 0
      %p121 = por %p119, %p120
      %p122 = scmp.ne.s32.totalorder %s114, %s116
      %p123 = scmp.eq.s32.totalorder %s22, 1
      %p124 = por %p122, %p123
      %p125 = scmp.ne.s32.totalorder %s116, %s117
      %p126 = scmp.eq.s32.totalorder %s22, 0
      %p127 = por %p125, %p126
      %p128 = scmp.ne.s32.totalorder %s116, %s117
      %p129 = scmp.eq.s32.totalorder %s23, 1
      %p130 = por %p128, %p129
      %p132 = scmp.ne.s32.totalorder %s117, %s131
      %p133 = scmp.eq.s32.totalorder %s23, 0
      %p134 = por %p132, %p133
      %s136 = sadd.s32 %s135, 1
      %p139 = scmp.eq.s32.totalorder %s17, 1
      %p140 = scmp.ne.s32.totalorder %s135, %s137
      %p141 = scmp.eq.s32.totalorder %s17, 0
      %p142 = por %p140, %p141
      %p143 = scmp.ne.s32.totalorder %s135, %s137
      %p144 = scmp.eq.s32.totalorder %s22, 1
      %p145 = por %p143, %p144
      %p146 = scmp.ne.s32.totalorder %s137, %s138
      %p147 = scmp.eq.s32.totalorder %s22, 0
      %p148 = por %p146, %p147
      %p149 = scmp.ne.s32.totalorder %s137, %s138
      %p150 = scmp.eq.s32.totalorder %s23, 1
      %p151 = por %p149, %p150
      %p153 = scmp.ne.s32.totalorder %s138, %s152
      %p154 = scmp.eq.s32.totalorder %s23, 0
      %p155 = por %p153, %p154
      %s157 = sadd.s32 %s156, 1
      %p160 = scmp.eq.s32.totalorder %s17, 1
      %p161 = scmp.ne.s32.totalorder %s156, %s158
      %p162 = scmp.eq.s32.totalorder %s17, 0
      %p163 = por %p161, %p162
      %p164 = scmp.ne.s32.totalorder %s156, %s158
      %p165 = scmp.eq.s32.totalorder %s22, 1
      %p166 = por %p164, %p165
      %p167 = scmp.ne.s32.totalorder %s158, %s159
      %p168 = scmp.eq.s32.totalorder %s22, 0
      %p169 = por %p167, %p168
      %p170 = scmp.ne.s32.totalorder %s158, %s159
      %p171 = scmp.eq.s32.totalorder %s23, 1
      %p172 = por %p170, %p171
      %p174 = scmp.ne.s32.totalorder %s159, %s173
      %p175 = scmp.eq.s32.totalorder %s23, 0
      %p176 = por %p174, %p175
      %s178 = sadd.s32 %s177, 1
      %p181 = scmp.eq.s32.totalorder %s17, 1
      %p182 = scmp.ne.s32.totalorder %s177, %s179
      %p183 = scmp.eq.s32.totalorder %s17, 0
      %p184 = por %p182, %p183
      %p185 = scmp.ne.s32.totalorder %s177, %s179
      %p186 = scmp.eq.s32.totalorder %s22, 1
      %p187 = por %p185, %p186
      %p188 = scmp.ne.s32.totalorder %s179, %s180
      %p189 = scmp.eq.s32.totalorder %s22, 0
      %p190 = por %p188, %p189
      %p191 = scmp.ne.s32.totalorder %s179, %s180
      %p192 = scmp.eq.s32.totalorder %s23, 1
      %p193 = por %p191, %p192
      %p195 = scmp.ne.s32.totalorder %s180, %s194
      %p196 = scmp.eq.s32.totalorder %s23, 0
      %p197 = por %p195, %p196
      %p198 = scmp.le.s32.totalorder 1, %s17
      %p199 = scmp.lt.s32.totalorder %s17, 3
      %p200 = pnand %p198, %p199
      %p201 = pneg %p200
      // Predicated region
      $region9: #{stochastic_actor_forward.1} parent=5 // pred_check
        _
      $region10: #{stochastic_actor_forward.1} parent=5 // pred_check_branch
        %203 = sbr.rel (%p200) target = $region12
      $region11: #{stochastic_actor_forward.1} parent=5 // pred_region
        %s204 = ssub.s32 %s17, 1
        // Predicated region
        $region13: #{stochastic_actor_forward.1} parent=11 // pred_check
          %p205 = pneg %p106
        $region14: #{stochastic_actor_forward.1} parent=11 // pred_check_branch
          %207 = sbr.rel (%p205) target = $region16
        $region15: #{stochastic_actor_forward.1} parent=11 // pred_region
          _
        $region16: #{stochastic_actor_forward.1} parent=11 // pred_fallthru
          _
        // Predicated region
        $region17: #{stochastic_actor_forward.1} parent=11 // pred_check
          %p208 = pneg %p127
        $region18: #{stochastic_actor_forward.1} parent=11 // pred_check_branch
          %210 = sbr.rel (%p208) target = $region20
        $region19: #{stochastic_actor_forward.1} parent=11 // pred_region
          %s212 = ssub.s32 1024, 1024
          %213 = vsyncadd [#allocation6], %s212
          %s214 = sshll.u32 [#allocation5], 4
          %s215 = int_to_ptr.vmem [resolvable:$true] %s214
          %220 = dma.hbm_to_vmem [thread:$0]  %s3, 1024, %s215, [#allocation6], 128, 128, 8
        $region20: #{stochastic_actor_forward.1} parent=11 // pred_fallthru
          _
        // Predicated region
        $region21: #{stochastic_actor_forward.1} parent=11 // pred_check
          %p221 = pneg %p148
        $region22: #{stochastic_actor_forward.1} parent=11 // pred_check_branch
          %223 = sbr.rel (%p221) target = $region24
        $region23: #{stochastic_actor_forward.1} parent=11 // pred_region
          %s225 = ssub.s32 4096, 4096
          %226 = vsyncadd [#allocation6], %s225
          %s227 = sshll.u32 [#allocation7], 4
          %s228 = int_to_ptr.vmem [resolvable:$true] %s227
          %233 = dma.hbm_to_vmem [thread:$0]  %s4, 4096, %s228, [#allocation6], 128, 128, 8
        $region24: #{stochastic_actor_forward.1} parent=11 // pred_fallthru
          _
        // Predicated region
        $region25: #{stochastic_actor_forward.1} parent=11 // pred_check
          %p234 = pneg %p169
        $region26: #{stochastic_actor_forward.1} parent=11 // pred_check_branch
          %236 = sbr.rel (%p234) target = $region28
        $region27: #{stochastic_actor_forward.1} parent=11 // pred_region
          %s238 = ssub.s32 2048, 2048
          %239 = vsyncadd [#allocation9], %s238
          %s240 = sshll.u32 [#allocation8], 4
          %s241 = int_to_ptr.vmem [resolvable:$true] %s240
          %246 = dma.hbm_to_vmem [thread:$0]  %s5, 2048, %s241, [#allocation9], 64, 64, 4
        $region28: #{stochastic_actor_forward.1} parent=11 // pred_fallthru
          _
      $region12: #{stochastic_actor_forward.1} parent=5 // pred_fallthru
        _
      %p247 = scmp.lt.s32.totalorder %s17, 2
      // Predicated region
      $region29: #{stochastic_actor_forward.1} parent=5 // pred_check
        %p248 = pneg %p247
      $region30: #{stochastic_actor_forward.1} parent=5 // pred_check_branch
        %250 = sbr.rel (%p248) target = $region32
      $region31: #{stochastic_actor_forward.1} parent=5 // pred_region
        // Predicated region
        $region33: #{stochastic_actor_forward.1} parent=31 // pred_check
          %p251 = pneg %p51
        $region34: #{stochastic_actor_forward.1} parent=31 // pred_check_branch
          %253 = sbr.rel (%p251) target = $region36
        $region35: #{stochastic_actor_forward.1} parent=31 // pred_region
          %p254 = scmp.lt.s32.totalorder %s24, 1
          %s255 = scalar_select %p254, %s24, 1
          %p256 = scmp.lt.s32.totalorder %s25, 0
          %s257 = scalar_select %p256, %s25, 0
          %s258 = sadd.s32 %s257, %s255
          %s259 = smul.addr %s258, 4
          %s260 = scalar_lea.vmem %s0, %s259
        $region36: #{stochastic_actor_forward.1} parent=31 // pred_fallthru
          _
        // Predicated region
        $region37: #{stochastic_actor_forward.1} parent=31 // pred_check
          %p261 = pneg %p79
        $region38: #{stochastic_actor_forward.1} parent=31 // pred_check_branch
          %263 = sbr.rel (%p261) target = $region40
        $region39: #{stochastic_actor_forward.1} parent=31 // pred_region
          %s264 = sand.u32 %s69, 1
          %s265 = scalar_lea.sflag [#allocation4], %s264
          %s266 = sand.u32 %s69, 1
          %s267 = smul.addr %s266, 32
          %s268 = scalar_lea.vmem [#allocation3], %s267
          %s270 = ssub.s32 512, 512
          %271 = vsyncadd %s265, %s270
          %s272 = smul.addr %s24, 8
          %s273 = sadd.s32 %s25, %s272
          %s274 = smul.addr %s273, 64
          %s275 = scalar_lea.hbm %s1, %s274
          %s276 = sshll.u32 %s268, 4
          %s277 = int_to_ptr.vmem [resolvable:$true] %s276
          %282 = dma.hbm_to_vmem [thread:$0]  %s275, 512, %s277, %s265, 64, 64, 4
        $region40: #{stochastic_actor_forward.1} parent=31 // pred_fallthru
          _
      $region32: #{stochastic_actor_forward.1} parent=5 // pred_fallthru
        _
      %p283 = scmp.le.s32.totalorder 1, %s17
      %p284 = scmp.lt.s32.totalorder %s17, 3
      %p285 = pnand %p283, %p284
      %p286 = pneg %p285
      // Predicated region
      $region41: #{stochastic_actor_forward.1} parent=5 // pred_check
        _
      $region42: #{stochastic_actor_forward.1} parent=5 // pred_check_branch
        %288 = sbr.rel (%p285) target = $region44
      $region43: #{stochastic_actor_forward.1} parent=5 // pred_region
        %s289 = ssub.s32 %s17, 1
        %s290 = sand.u32 %s72, 1
        %s291 = scalar_lea.sflag [#allocation4], %s290
        %s292 = sand.u32 %s72, 1
        %s293 = smul.addr %s292, 32
        %s294 = scalar_lea.vmem [#allocation3], %s293
        // Predicated region
        $region45: #{stochastic_actor_forward.1} parent=43 // pred_check
          %p295 = pneg %p85
        $region46: #{stochastic_actor_forward.1} parent=43 // pred_check_branch
          %297 = sbr.rel (%p295) target = $region48
        $region47: #{stochastic_actor_forward.1} parent=43 // pred_region
          %298 = dma.done %s291, 512
        $region48: #{stochastic_actor_forward.1} parent=43 // pred_fallthru
          _
        // Predicated region
        $region49: #{stochastic_actor_forward.1} parent=43 // pred_check
          %p299 = pneg %p127
        $region50: #{stochastic_actor_forward.1} parent=43 // pred_check_branch
          %301 = sbr.rel (%p299) target = $region52
        $region51: #{stochastic_actor_forward.1} parent=43 // pred_region
          %302 = dma.done [#allocation6], 1024
        $region52: #{stochastic_actor_forward.1} parent=43 // pred_fallthru
          _
        // Predicated region
        $region53: #{stochastic_actor_forward.1} parent=43 // pred_check
          %p303 = pneg %p148
        $region54: #{stochastic_actor_forward.1} parent=43 // pred_check_branch
          %305 = sbr.rel (%p303) target = $region56
        $region55: #{stochastic_actor_forward.1} parent=43 // pred_region
          %306 = dma.done [#allocation6], 4096
        $region56: #{stochastic_actor_forward.1} parent=43 // pred_fallthru
          _
        // Predicated region
        $region57: #{stochastic_actor_forward.1} parent=43 // pred_check
          %p307 = pneg %p169
        $region58: #{stochastic_actor_forward.1} parent=43 // pred_check_branch
          %309 = sbr.rel (%p307) target = $region60
        $region59: #{stochastic_actor_forward.1} parent=43 // pred_region
          %310 = dma.done [#allocation9], 2048
        $region60: #{stochastic_actor_forward.1} parent=43 // pred_fallthru
          _
        %p311 = scmp.lt.s32.totalorder %s26, 1
        %s312 = scalar_select %p311, %s26, 1
        %p313 = scmp.lt.s32.totalorder %s27, 0
        %s314 = scalar_select %p313, %s27, 0
        %s315 = sadd.s32 %s314, %s312
        %s316 = smul.addr %s315, 4
        %s317 = scalar_lea.vmem %s0, %s316
        %p318 = pneg %p57
        %p319 = pneg %p54
        %s320 = sand.u32 %s72, 1
        %s321 = scalar_lea.sflag [#allocation4], %s320
        %s322 = sand.u32 %s72, 1
        %s323 = smul.addr %s322, 32
        %s324 = scalar_lea.vmem [#allocation3], %s323
        %p325 = pneg %p85
        %p326 = pneg %p82
        %p327 = pneg %p106
        %p328 = pneg %p103
        %p329 = pneg %p127
        %p330 = pneg %p124
        %p331 = pneg %p148
        %p332 = pneg %p145
        %p333 = pneg %p169
        %p334 = pneg %p166
        %p335 = pneg %p190
        %p336 = pneg %p187
        %p337 = scmp.lt.s32.totalorder %s26, 1
        %s338 = scalar_select %p337, %s26, 1
        %p339 = scmp.lt.s32.totalorder %s27, 0
        %s340 = scalar_select %p339, %s27, 0
        %s341 = sadd.s32 %s340, %s338
        %s342 = smul.addr %s341, 4
        %s343 = scalar_lea.vmem %s0, %s342
        %p345 = scmp.eq.s32.totalorder %s26, 0
        %p346 = scmp.eq.s32.totalorder %s27, 0
        %p347 = pnand %p345, %p346
        %p348 = pneg %p347
        // Predicated region
        $region61: #{stochastic_actor_forward.1} parent=43 // pred_check
          _
        $region62: #{stochastic_actor_forward.1} parent=43 // pred_check_branch
          %350 = sbr.rel (%p347) target = $region64
        $region63: #{stochastic_actor_forward.1} parent=43 // pred_region
          %vm351 = vcmask 523264
          %352 = vst.msk [vmem:[#allocation2] sm:$0xff] %vm351, 0.0
        $region64: #{stochastic_actor_forward.1} parent=43 // pred_fallthru
          _
        %v353 = vld [vmem:[#allocation2] sm:$0xff]
        %v354 = vld [vmem:[%s343] sm:$0xf]
        %v355 = vld [vmem:[%s294] sm:$0xf]
        %v356 = vld [vmem:[%s294 + $0x4] sm:$0xf]
        %v357 = vld [vmem:[%s294 + $0x8] sm:$0xf]
        %v358 = vld [vmem:[%s294 + $0xc] sm:$0xf]
        %v359 = vld [vmem:[%s294 + $0x10] sm:$0xf]
        %v360 = vld [vmem:[%s294 + $0x14] sm:$0xf]
        %v361 = vld [vmem:[%s294 + $0x18] sm:$0xf]
        %v362 = vld [vmem:[%s294 + $0x1c] sm:$0xf]
        %v371 = vunpack.c.l.b16 %v355
        %v372 = vunpack.c.l.b16 %v356
        %v373 = vunpack.c.l.b16 %v357
        %v374 = vunpack.c.l.b16 %v358
        %v375 = vunpack.c.l.b16 %v359
        %v376 = vunpack.c.l.b16 %v360
        %v377 = vunpack.c.l.b16 %v361
        %v378 = vunpack.c.l.b16 %v362
        %v379 = vpack.c.b16 %v372, %v371
        %v380 = vpack.c.b16 %v374, %v373
        %v381 = vpack.c.b16 %v376, %v375
        %v382 = vpack.c.b16 %v378, %v377
        %387 = vmatprep.subr.bf16.mxu0 0
        %388 = vmatpush1.bf16.xpose.msra.mxu0 %v379
        %389 = vmatprep.subr.bf16.mxu0 0
        %390 = vmatpush1.bf16.xpose.msra.mxu0 %v380
        %391 = vmatprep.subr.bf16.mxu0 0
        %392 = vmatpush1.bf16.xpose.msra.mxu0 %v381
        %393 = vmatprep.subr.bf16.mxu0 0
        %394 = vmatpush1.bf16.xpose.msra.mxu0 %v382
        %395 = vmatprep.subr.bf16.mxu0 0
        %396 = vmatpush1.bf16.xpose.msra.mxu0 0
        %397 = vmatprep.subr.bf16.mxu0 0
        %398 = vmatpush1.bf16.xpose.msra.mxu0 0
        %399 = vmatprep.subr.bf16.mxu0 0
        %400 = vmatpush1.bf16.xpose.msra.mxu0 0
        %401 = vmatprep.subr.bf16.mxu0 0
        %402 = vmatpush1.bf16.xpose.msra.mxu0 0
        %403 = vmatprep.subr.bf16.mxu0 0
        %404 = vmatpush1.bf16.xpose.msra.mxu0 0
        %405 = vmatprep.subr.bf16.mxu0 0
        %406 = vmatpush1.bf16.xpose.msra.mxu0 0
        %407 = vmatprep.subr.bf16.mxu0 0
        %408 = vmatpush1.bf16.xpose.msra.mxu0 0
        %409 = vmatprep.subr.bf16.mxu0 0
        %410 = vmatpush1.bf16.xpose.msra.mxu0 0
        %411 = vmatprep.subr.bf16.mxu0 0
        %412 = vmatpush1.bf16.xpose.msra.mxu0 0
        %413 = vmatprep.subr.bf16.mxu0 0
        %414 = vmatpush1.bf16.xpose.msra.mxu0 0
        %415 = vmatprep.subr.bf16.mxu0 0
        %416 = vmatpush1.bf16.xpose.msra.mxu0 0
        %417 = vmatprep.subr.bf16.mxu0 0
        %418 = vmatpush1.bf16.xpose.msra.mxu0 0
        %419 = vmatprep.mubr.bf16.mxu0 0
        %420 = vmatmul.mubr.bf16.gmra.mrb[0].mxu0 %v354
        %v421 = vpop.f32.mrb[0].mxu0
        %v422 = vadd.f32 0.0, %v421
        %v423 = vpop.f32.mrb[0].mxu0
        %v424 = vpop.f32.mrb[0].mxu0
        %v425 = vpop.f32.mrb[0].mxu0
        %426 = vdwg.mxu0
        %v427 = vadd.f32 %v353, %v422
        %vm428 = vcmask 523264
        %429 = vst.msk [vmem:[#allocation2] sm:$0xff] %vm428, %v427
        %p430 = scmp.eq.s32.totalorder %s26, 1
        %p431 = pnand %p430, %p346
        %p432 = pneg %p431
        // Predicated region
        $region65: #{stochastic_actor_forward.1} parent=43 // pred_check
          _
        $region66: #{stochastic_actor_forward.1} parent=43 // pred_check_branch
          %434 = sbr.rel (%p431) target = $region68
        $region67: #{stochastic_actor_forward.1} parent=43 // pred_region
          %v435 = vld [vmem:[%s2] ss:$0 sm:$0xff]
          %v436 = vld [vmem:[%s2 + $0x1] ss:$0 sm:$0xff]
          %v437 = vld [vmem:[%s2 + $0x2] ss:$0 sm:$0xff]
          %s438 = scalar_lea.vmem %s2, 3
          %v439 = vld [vmem:[%s438] ss:$8 sm:$0x3]
          %s440 = scalar_lea.vmem %s2, 4
          %v441 = vld [vmem:[%s440] ss:$8 sm:$0x3]
          %v442 = vld [vmem:[%s2 + $0x5] ss:$0 sm:$0xff]
          %v443 = vld [vmem:[#allocation2] sm:$0xff]
          %v444 = vadd.f32 %v443, %v435
          %v445 = vlaneseq
          %v446 = vand.u32 %v445, 127
          %vm447 = vcmp.lt.s32.totalorder %v446, 50
          %v448 = vsel %vm428, %v444, 0.0
          %449 = vadd.xlane.f32.xlu0 %v448
          %v450 = vpop.xlane.xlu0 %449
          %v451 = vmul.f32 %v450, 0.02
          %v452 = vsub.f32 %v444, %v451
          %v453 = vsel %vm447, %v452, 0.0
          %v454 = vmul.f32 %v453, %v453
          %v455 = vsel %vm428, %v454, 0.0
          %456 = vadd.xlane.f32.xlu0 %v455
          %v457 = vpop.xlane.xlu0 %456
          %v458 = vmul.f32 %v457, 0.02
          %v459 = vadd.f32 %v458, 1e-05
          %v460 = vrsqrt.pop %v459
          %v461 = vmul.f32 %v453, %v460
          %v462 = vmul.f32 %v461, %v436
          %v463 = vadd.f32 %v462, %v437
          %v464 = vtanh.pop %v463
          %v465 = vpack.c.bf16 %v464, %v464
          %v466 = vld [vmem:[#allocation5] sm:$0xff]
          %v467 = vld [vmem:[#allocation5 + $0x8] sm:$0xff]
          %v468 = vld [vmem:[#allocation5 + $0x10] sm:$0xff]
          %v469 = vld [vmem:[#allocation5 + $0x18] sm:$0xff]
          %v470 = vld [vmem:[#allocation5 + $0x20] sm:$0xff]
          %v471 = vld [vmem:[#allocation5 + $0x28] sm:$0xff]
          %v472 = vld [vmem:[#allocation5 + $0x30] sm:$0xff]
          %v473 = vld [vmem:[#allocation5 + $0x38] sm:$0xff]
          %v475 = vlaneseq
          %v476 = vshrl.u32 %v475, 7
          %v477 = vsub.s32 0, %v476
          %v478 = vrot.slane %v439, %v477
          %v479 = vlaneseq
          %v480 = vshrl.u32 %v479, 7
          %v481 = vsub.s32 1, %v480
          %v482 = vrot.slane %v439, %v481
          %v493 = vunpack.c.l.b16 %v466
          %v494 = vunpack.c.h.b16 %v466
          %v495 = vunpack.c.l.b16 %v467
          %v496 = vunpack.c.h.b16 %v467
          %v497 = vunpack.c.l.b16 %v468
          %v498 = vunpack.c.h.b16 %v468
          %v499 = vunpack.c.l.b16 %v469
          %v500 = vunpack.c.h.b16 %v469
          %v501 = vunpack.c.l.b16 %v470
          %v502 = vunpack.c.h.b16 %v470
          %v503 = vunpack.c.l.b16 %v471
          %v504 = vunpack.c.h.b16 %v471
          %v505 = vunpack.c.l.b16 %v472
          %v506 = vunpack.c.h.b16 %v472
          %v507 = vunpack.c.l.b16 %v473
          %v508 = vunpack.c.h.b16 %v473
          %v509 = vpack.c.b16 %v495, %v493
          %v510 = vpack.c.b16 %v496, %v494
          %v511 = vpack.c.b16 %v499, %v497
          %v512 = vpack.c.b16 %v500, %v498
          %v513 = vpack.c.b16 %v503, %v501
          %v514 = vpack.c.b16 %v504, %v502
          %v515 = vpack.c.b16 %v507, %v505
          %v516 = vpack.c.b16 %v508, %v506
          %v526 = vsel %vm428, %v465, 0
          %528 = vmatprep.subr.bf16.mxu0 %v510
          %529 = vmatpush1.bf16.msra.mxu0 %v509
          %530 = vmatprep.subr.bf16.mxu0 %v512
          %531 = vmatpush1.bf16.msra.mxu0 %v511
          %532 = vmatprep.subr.bf16.mxu0 %v514
          %533 = vmatpush1.bf16.msra.mxu0 %v513
          %534 = vmatprep.subr.bf16.mxu0 %v516
          %535 = vmatpush1.bf16.msra.mxu0 %v515
          %536 = vmatprep.subr.bf16.mxu0 0
          %537 = vmatpush1.bf16.msra.mxu0 0
          %538 = vmatprep.subr.bf16.mxu0 0
          %539 = vmatpush1.bf16.msra.mxu0 0
          %540 = vmatprep.subr.bf16.mxu0 0
          %541 = vmatpush1.bf16.msra.mxu0 0
          %542 = vmatprep.subr.bf16.mxu0 0
          %543 = vmatpush1.bf16.msra.mxu0 0
          %544 = vmatprep.subr.bf16.mxu0 0
          %545 = vmatpush1.bf16.msra.mxu0 0
          %546 = vmatprep.subr.bf16.mxu0 0
          %547 = vmatpush1.bf16.msra.mxu0 0
          %548 = vmatprep.subr.bf16.mxu0 0
          %549 = vmatpush1.bf16.msra.mxu0 0
          %550 = vmatprep.subr.bf16.mxu0 0
          %551 = vmatpush1.bf16.msra.mxu0 0
          %552 = vmatprep.subr.bf16.mxu0 0
          %553 = vmatpush1.bf16.msra.mxu0 0
          %554 = vmatprep.subr.bf16.mxu0 0
          %555 = vmatpush1.bf16.msra.mxu0 0
          %556 = vmatprep.subr.bf16.mxu0 0
          %557 = vmatpush1.bf16.msra.mxu0 0
          %558 = vmatprep.subr.bf16.mxu0 0
          %559 = vmatpush1.bf16.msra.mxu0 0
          %560 = vmatprep.mubr.bf16.mxu0 0
          %561 = vmatmul.mubr.bf16.gmra.mrb[0].mxu0 %v526
          %v562 = vpop.f32.mrb[0].mxu0
          %v563 = vadd.f32 %v478, %v562
          %v564 = vpop.f32.mrb[0].mxu0
          %v565 = vadd.f32 %v482, %v564
          %v566 = vpop.f32.mrb[0].mxu0
          %v567 = vpop.f32.mrb[0].mxu0
          %568 = vdwg.mxu0
          %v569 = vmax.f32 %v563, 0.0
          %v570 = vmax.f32 %v565, 0.0
          %v571 = vpack.c.bf16 %v569, %v569
          %v572 = vpack.c.bf16 %v570, %v570
          %v573 = vld [vmem:[#allocation7] sm:$0xff]
          %v574 = vld [vmem:[#allocation7 + $0x8] sm:$0xff]
          %v575 = vld [vmem:[#allocation7 + $0x10] sm:$0xff]
          %v576 = vld [vmem:[#allocation7 + $0x18] sm:$0xff]
          %v577 = vld [vmem:[#allocation7 + $0x20] sm:$0xff]
          %v578 = vld [vmem:[#allocation7 + $0x28] sm:$0xff]
          %v579 = vld [vmem:[#allocation7 + $0x30] sm:$0xff]
          %v580 = vld [vmem:[#allocation7 + $0x38] sm:$0xff]
          %v581 = vld [vmem:[#allocation7 + $0x40] sm:$0xff]
          %v582 = vld [vmem:[#allocation7 + $0x48] sm:$0xff]
          %v583 = vld [vmem:[#allocation7 + $0x50] sm:$0xff]
          %v584 = vld [vmem:[#allocation7 + $0x58] sm:$0xff]
          %v585 = vld [vmem:[#allocation7 + $0x60] sm:$0xff]
          %v586 = vld [vmem:[#allocation7 + $0x68] sm:$0xff]
          %v587 = vld [vmem:[#allocation7 + $0x70] sm:$0xff]
          %v588 = vld [vmem:[#allocation7 + $0x78] sm:$0xff]
          %v589 = vld [vmem:[#allocation7 + $0x80] sm:$0xff]
          %v590 = vld [vmem:[#allocation7 + $0x88] sm:$0xff]
          %v591 = vld [vmem:[#allocation7 + $0x90] sm:$0xff]
          %v592 = vld [vmem:[#allocation7 + $0x98] sm:$0xff]
          %v593 = vld [vmem:[#allocation7 + $0xa0] sm:$0xff]
          %v594 = vld [vmem:[#allocation7 + $0xa8] sm:$0xff]
          %v595 = vld [vmem:[#allocation7 + $0xb0] sm:$0xff]
          %v596 = vld [vmem:[#allocation7 + $0xb8] sm:$0xff]
          %v597 = vld [vmem:[#allocation7 + $0xc0] sm:$0xff]
          %v598 = vld [vmem:[#allocation7 + $0xc8] sm:$0xff]
          %v599 = vld [vmem:[#allocation7 + $0xd0] sm:$0xff]
          %v600 = vld [vmem:[#allocation7 + $0xd8] sm:$0xff]
          %v601 = vld [vmem:[#allocation7 + $0xe0] sm:$0xff]
          %v602 = vld [vmem:[#allocation7 + $0xe8] sm:$0xff]
          %v603 = vld [vmem:[#allocation7 + $0xf0] sm:$0xff]
          %v604 = vld [vmem:[#allocation7 + $0xf8] sm:$0xff]
          %v606 = vlaneseq
          %v607 = vshrl.u32 %v606, 7
          %v608 = vsub.s32 0, %v607
          %v609 = vrot.slane %v441, %v608
          %v610 = vlaneseq
          %v611 = vshrl.u32 %v610, 7
          %v612 = vsub.s32 1, %v611
          %v613 = vrot.slane %v441, %v612
          %v648 = vunpack.c.l.b16 %v573
          %v649 = vunpack.c.h.b16 %v573
          %v650 = vunpack.c.l.b16 %v574
          %v651 = vunpack.c.h.b16 %v574
          %v652 = vunpack.c.l.b16 %v575
          %v653 = vunpack.c.h.b16 %v575
          %v654 = vunpack.c.l.b16 %v576
          %v655 = vunpack.c.h.b16 %v576
          %v656 = vunpack.c.l.b16 %v577
          %v657 = vunpack.c.h.b16 %v577
          %v658 = vunpack.c.l.b16 %v578
          %v659 = vunpack.c.h.b16 %v578
          %v660 = vunpack.c.l.b16 %v579
          %v661 = vunpack.c.h.b16 %v579
          %v662 = vunpack.c.l.b16 %v580
          %v663 = vunpack.c.h.b16 %v580
          %v664 = vunpack.c.l.b16 %v581
          %v665 = vunpack.c.h.b16 %v581
          %v666 = vunpack.c.l.b16 %v582
          %v667 = vunpack.c.h.b16 %v582
          %v668 = vunpack.c.l.b16 %v583
          %v669 = vunpack.c.h.b16 %v583
          %v670 = vunpack.c.l.b16 %v584
          %v671 = vunpack.c.h.b16 %v584
          %v672 = vunpack.c.l.b16 %v585
          %v673 = vunpack.c.h.b16 %v585
          %v674 = vunpack.c.l.b16 %v586
          %v675 = vunpack.c.h.b16 %v586
          %v676 = vunpack.c.l.b16 %v587
          %v677 = vunpack.c.h.b16 %v587
          %v678 = vunpack.c.l.b16 %v588
          %v679 = vunpack.c.h.b16 %v588
          %v680 = vunpack.c.l.b16 %v589
          %v681 = vunpack.c.h.b16 %v589
          %v682 = vunpack.c.l.b16 %v590
          %v683 = vunpack.c.h.b16 %v590
          %v684 = vunpack.c.l.b16 %v591
          %v685 = vunpack.c.h.b16 %v591
          %v686 = vunpack.c.l.b16 %v592
          %v687 = vunpack.c.h.b16 %v592
          %v688 = vunpack.c.l.b16 %v593
          %v689 = vunpack.c.h.b16 %v593
          %v690 = vunpack.c.l.b16 %v594
          %v691 = vunpack.c.h.b16 %v594
          %v692 = vunpack.c.l.b16 %v595
          %v693 = vunpack.c.h.b16 %v595
          %v694 = vunpack.c.l.b16 %v596
          %v695 = vunpack.c.h.b16 %v596
          %v696 = vunpack.c.l.b16 %v597
          %v697 = vunpack.c.h.b16 %v597
          %v698 = vunpack.c.l.b16 %v598
          %v699 = vunpack.c.h.b16 %v598
          %v700 = vunpack.c.l.b16 %v599
          %v701 = vunpack.c.h.b16 %v599
          %v702 = vunpack.c.l.b16 %v600
          %v703 = vunpack.c.h.b16 %v600
          %v704 = vunpack.c.l.b16 %v601
          %v705 = vunpack.c.h.b16 %v601
          %v706 = vunpack.c.l.b16 %v602
          %v707 = vunpack.c.h.b16 %v602
          %v708 = vunpack.c.l.b16 %v603
          %v709 = vunpack.c.h.b16 %v603
          %v710 = vunpack.c.l.b16 %v604
          %v711 = vunpack.c.h.b16 %v604
          %v712 = vpack.c.b16 %v650, %v648
          %v713 = vpack.c.b16 %v651, %v649
          %v714 = vpack.c.b16 %v654, %v652
          %v715 = vpack.c.b16 %v655, %v653
          %v716 = vpack.c.b16 %v658, %v656
          %v717 = vpack.c.b16 %v659, %v657
          %v718 = vpack.c.b16 %v662, %v660
          %v719 = vpack.c.b16 %v663, %v661
          %v720 = vpack.c.b16 %v666, %v664
          %v721 = vpack.c.b16 %v667, %v665
          %v722 = vpack.c.b16 %v670, %v668
          %v723 = vpack.c.b16 %v671, %v669
          %v724 = vpack.c.b16 %v674, %v672
          %v725 = vpack.c.b16 %v675, %v673
          %v726 = vpack.c.b16 %v678, %v676
          %v727 = vpack.c.b16 %v679, %v677
          %v728 = vpack.c.b16 %v682, %v680
          %v729 = vpack.c.b16 %v683, %v681
          %v730 = vpack.c.b16 %v686, %v684
          %v731 = vpack.c.b16 %v687, %v685
          %v732 = vpack.c.b16 %v690, %v688
          %v733 = vpack.c.b16 %v691, %v689
          %v734 = vpack.c.b16 %v694, %v692
          %v735 = vpack.c.b16 %v695, %v693
          %v736 = vpack.c.b16 %v698, %v696
          %v737 = vpack.c.b16 %v699, %v697
          %v738 = vpack.c.b16 %v702, %v700
          %v739 = vpack.c.b16 %v703, %v701
          %v740 = vpack.c.b16 %v706, %v704
          %v741 = vpack.c.b16 %v707, %v705
          %v742 = vpack.c.b16 %v710, %v708
          %v743 = vpack.c.b16 %v711, %v709
          %776 = vmatprep.subr.bf16.mxu0 %v713
          %777 = vmatpush1.bf16.msra.mxu0 %v712
          %778 = vmatprep.subr.bf16.mxu0 %v715
          %779 = vmatpush1.bf16.msra.mxu0 %v714
          %780 = vmatprep.subr.bf16.mxu0 %v717
          %781 = vmatpush1.bf16.msra.mxu0 %v716
          %782 = vmatprep.subr.bf16.mxu0 %v719
          %783 = vmatpush1.bf16.msra.mxu0 %v718
          %784 = vmatprep.subr.bf16.mxu0 %v721
          %785 = vmatpush1.bf16.msra.mxu0 %v720
          %786 = vmatprep.subr.bf16.mxu0 %v723
          %787 = vmatpush1.bf16.msra.mxu0 %v722
          %788 = vmatprep.subr.bf16.mxu0 %v725
          %789 = vmatpush1.bf16.msra.mxu0 %v724
          %790 = vmatprep.subr.bf16.mxu0 %v727
          %791 = vmatpush1.bf16.msra.mxu0 %v726
          %792 = vmatprep.subr.bf16.mxu0 %v729
          %793 = vmatpush1.bf16.msra.mxu0 %v728
          %794 = vmatprep.subr.bf16.mxu0 %v731
          %795 = vmatpush1.bf16.msra.mxu0 %v730
          %796 = vmatprep.subr.bf16.mxu0 %v733
          %797 = vmatpush1.bf16.msra.mxu0 %v732
          %798 = vmatprep.subr.bf16.mxu0 %v735
          %799 = vmatpush1.bf16.msra.mxu0 %v734
          %800 = vmatprep.subr.bf16.mxu0 %v737
          %801 = vmatpush1.bf16.msra.mxu0 %v736
          %802 = vmatprep.subr.bf16.mxu0 %v739
          %803 = vmatpush1.bf16.msra.mxu0 %v738
          %804 = vmatprep.subr.bf16.mxu0 %v741
          %805 = vmatpush1.bf16.msra.mxu0 %v740
          %806 = vmatprep.subr.bf16.mxu0 %v743
          %807 = vmatpush1.bf16.msra.mxu0 %v742
          %808 = vmatprep.mubr.bf16.mxu0 %v572
          %809 = vmatmul.mubr.bf16.gmra.mrb[0].mxu0 %v571
          %v810 = vpop.f32.mrb[0].mxu0
          %v811 = vadd.f32 %v609, %v810
          %v812 = vpop.f32.mrb[0].mxu0
          %v813 = vadd.f32 %v613, %v812
          %v814 = vpop.f32.mrb[0].mxu0
          %v815 = vpop.f32.mrb[0].mxu0
          %816 = vdwg.mxu0
          %v817 = vmax.f32 %v811, 0.0
          %v818 = vmax.f32 %v813, 0.0
          %v819 = vpack.c.bf16 %v817, %v817
          %v820 = vpack.c.bf16 %v818, %v818
          %v821 = vld [vmem:[#allocation8] sm:$0xf]
          %v822 = vld [vmem:[#allocation8 + $0x4] sm:$0xf]
          %v823 = vld [vmem:[#allocation8 + $0x8] sm:$0xf]
          %v824 = vld [vmem:[#allocation8 + $0xc] sm:$0xf]
          %v825 = vld [vmem:[#allocation8 + $0x10] sm:$0xf]
          %v826 = vld [vmem:[#allocation8 + $0x14] sm:$0xf]
          %v827 = vld [vmem:[#allocation8 + $0x18] sm:$0xf]
          %v828 = vld [vmem:[#allocation8 + $0x1c] sm:$0xf]
          %v829 = vld [vmem:[#allocation8 + $0x20] sm:$0xf]
          %v830 = vld [vmem:[#allocation8 + $0x24] sm:$0xf]
          %v831 = vld [vmem:[#allocation8 + $0x28] sm:$0xf]
          %v832 = vld [vmem:[#allocation8 + $0x2c] sm:$0xf]
          %v833 = vld [vmem:[#allocation8 + $0x30] sm:$0xf]
          %v834 = vld [vmem:[#allocation8 + $0x34] sm:$0xf]
          %v835 = vld [vmem:[#allocation8 + $0x38] sm:$0xf]
          %v836 = vld [vmem:[#allocation8 + $0x3c] sm:$0xf]
          %v837 = vld [vmem:[#allocation8 + $0x40] sm:$0xf]
          %v838 = vld [vmem:[#allocation8 + $0x44] sm:$0xf]
          %v839 = vld [vmem:[#allocation8 + $0x48] sm:$0xf]
          %v840 = vld [vmem:[#allocation8 + $0x4c] sm:$0xf]
          %v841 = vld [vmem:[#allocation8 + $0x50] sm:$0xf]
          %v842 = vld [vmem:[#allocation8 + $0x54] sm:$0xf]
          %v843 = vld [vmem:[#allocation8 + $0x58] sm:$0xf]
          %v844 = vld [vmem:[#allocation8 + $0x5c] sm:$0xf]
          %v845 = vld [vmem:[#allocation8 + $0x60] sm:$0xf]
          %v846 = vld [vmem:[#allocation8 + $0x64] sm:$0xf]
          %v847 = vld [vmem:[#allocation8 + $0x68] sm:$0xf]
          %v848 = vld [vmem:[#allocation8 + $0x6c] sm:$0xf]
          %v849 = vld [vmem:[#allocation8 + $0x70] sm:$0xf]
          %v850 = vld [vmem:[#allocation8 + $0x74] sm:$0xf]
          %v851 = vld [vmem:[#allocation8 + $0x78] sm:$0xf]
          %v852 = vld [vmem:[#allocation8 + $0x7c] sm:$0xf]
          %v885 = vunpack.c.l.b16 %v821
          %v886 = vunpack.c.l.b16 %v822
          %v887 = vunpack.c.l.b16 %v823
          %v888 = vunpack.c.l.b16 %v824
          %v889 = vunpack.c.l.b16 %v825
          %v890 = vunpack.c.l.b16 %v826
          %v891 = vunpack.c.l.b16 %v827
          %v892 = vunpack.c.l.b16 %v828
          %v893 = vunpack.c.l.b16 %v829
          %v894 = vunpack.c.l.b16 %v830
          %v895 = vunpack.c.l.b16 %v831
          %v896 = vunpack.c.l.b16 %v832
          %v897 = vunpack.c.l.b16 %v833
          %v898 = vunpack.c.l.b16 %v834
          %v899 = vunpack.c.l.b16 %v835
          %v900 = vunpack.c.l.b16 %v836
          %v901 = vunpack.c.l.b16 %v837
          %v902 = vunpack.c.l.b16 %v838
          %v903 = vunpack.c.l.b16 %v839
          %v904 = vunpack.c.l.b16 %v840
          %v905 = vunpack.c.l.b16 %v841
          %v906 = vunpack.c.l.b16 %v842
          %v907 = vunpack.c.l.b16 %v843
          %v908 = vunpack.c.l.b16 %v844
          %v909 = vunpack.c.l.b16 %v845
          %v910 = vunpack.c.l.b16 %v846
          %v911 = vunpack.c.l.b16 %v847
          %v912 = vunpack.c.l.b16 %v848
          %v913 = vunpack.c.l.b16 %v849
          %v914 = vunpack.c.l.b16 %v850
          %v915 = vunpack.c.l.b16 %v851
          %v916 = vunpack.c.l.b16 %v852
          %v917 = vpack.c.b16 %v886, %v885
          %v918 = vpack.c.b16 %v888, %v887
          %v919 = vpack.c.b16 %v890, %v889
          %v920 = vpack.c.b16 %v892, %v891
          %v921 = vpack.c.b16 %v894, %v893
          %v922 = vpack.c.b16 %v896, %v895
          %v923 = vpack.c.b16 %v898, %v897
          %v924 = vpack.c.b16 %v900, %v899
          %v925 = vpack.c.b16 %v902, %v901
          %v926 = vpack.c.b16 %v904, %v903
          %v927 = vpack.c.b16 %v906, %v905
          %v928 = vpack.c.b16 %v908, %v907
          %v929 = vpack.c.b16 %v910, %v909
          %v930 = vpack.c.b16 %v912, %v911
          %v931 = vpack.c.b16 %v914, %v913
          %v932 = vpack.c.b16 %v916, %v915
          %949 = vmatprep.subr.bf16.mxu0 0
          %950 = vmatpush1.bf16.msra.mxu0 %v917
          %951 = vmatprep.subr.bf16.mxu0 0
          %952 = vmatpush1.bf16.msra.mxu0 %v918
          %953 = vmatprep.subr.bf16.mxu0 0
          %954 = vmatpush1.bf16.msra.mxu0 %v919
          %955 = vmatprep.subr.bf16.mxu0 0
          %956 = vmatpush1.bf16.msra.mxu0 %v920
          %957 = vmatprep.subr.bf16.mxu0 0
          %958 = vmatpush1.bf16.msra.mxu0 %v921
          %959 = vmatprep.subr.bf16.mxu0 0
          %960 = vmatpush1.bf16.msra.mxu0 %v922
          %961 = vmatprep.subr.bf16.mxu0 0
          %962 = vmatpush1.bf16.msra.mxu0 %v923
          %963 = vmatprep.subr.bf16.mxu0 0
          %964 = vmatpush1.bf16.msra.mxu0 %v924
          %965 = vmatprep.subr.bf16.mxu0 0
          %966 = vmatpush1.bf16.msra.mxu0 %v925
          %967 = vmatprep.subr.bf16.mxu0 0
          %968 = vmatpush1.bf16.msra.mxu0 %v926
          %969 = vmatprep.subr.bf16.mxu0 0
          %970 = vmatpush1.bf16.msra.mxu0 %v927
          %971 = vmatprep.subr.bf16.mxu0 0
          %972 = vmatpush1.bf16.msra.mxu0 %v928
          %973 = vmatprep.subr.bf16.mxu0 0
          %974 = vmatpush1.bf16.msra.mxu0 %v929
          %975 = vmatprep.subr.bf16.mxu0 0
          %976 = vmatpush1.bf16.msra.mxu0 %v930
          %977 = vmatprep.subr.bf16.mxu0 0
          %978 = vmatpush1.bf16.msra.mxu0 %v931
          %979 = vmatprep.subr.bf16.mxu0 0
          %980 = vmatpush1.bf16.msra.mxu0 %v932
          %981 = vmatprep.mubr.bf16.mxu0 %v820
          %982 = vmatmul.mubr.bf16.gmra.mrb[0].mxu0 %v819
          %v983 = vpop.f32.mrb[0].mxu0
          %v984 = vadd.f32 %v442, %v983
          %v985 = vpop.f32.mrb[0].mxu0
          %v986 = vpop.f32.mrb[0].mxu0
          %v987 = vpop.f32.mrb[0].mxu0
          %988 = vdwg.mxu0
          %v989 = vtanh.pop %v984
          %v990 = vadd.f32 %v989, 1.0
          %v991 = vmul.f32 %v990, 0.5
          %v992 = vmul.f32 %v991, 12.0
          %v993 = vadd.f32 %v992, -10.0
          %v994 = vmul.f32 %v993, 1.442695
          %v995 = vpow.pop %v994
          %vm996 = vcmp.lt.s32.totalorder %v446, 6
          %v997 = vsel %vm996, %v984, %v995
          %998 = vst [vmem:[%s6] sm:$0xff] %v997
        $region68: #{stochastic_actor_forward.1} parent=43 // pred_fallthru
          _
        // Predicated region
        $region69: #{stochastic_actor_forward.1} parent=43 // pred_check
          %p999 = pneg %p187
        $region70: #{stochastic_actor_forward.1} parent=43 // pred_check_branch
          %1001 = sbr.rel (%p999) target = $region72
        $region71: #{stochastic_actor_forward.1} parent=43 // pred_region
          _
        $region72: #{stochastic_actor_forward.1} parent=43 // pred_fallthru
          _
        // Predicated region
        $region73: #{stochastic_actor_forward.1} parent=43 // pred_check
          %p1002 = pneg %p187
        $region74: #{stochastic_actor_forward.1} parent=43 // pred_check_branch
          %1004 = sbr.rel (%p1002) target = $region76
        $region75: #{stochastic_actor_forward.1} parent=43 // pred_region
          _
        $region76: #{stochastic_actor_forward.1} parent=43 // pred_fallthru
          _
      $region44: #{stochastic_actor_forward.1} parent=5 // pred_fallthru
        _
      %p1005 = scmp.le.s32.totalorder 2, %s17
      // Predicated region
      $region77: #{stochastic_actor_forward.1} parent=5 // pred_check
        %p1006 = pneg %p1005
      $region78: #{stochastic_actor_forward.1} parent=5 // pred_check_branch
        %1008 = sbr.rel (%p1006) target = $region80
      $region79: #{stochastic_actor_forward.1} parent=5 // pred_region
        %s1009 = ssub.s32 %s17, 2
      $region80: #{stochastic_actor_forward.1} parent=5 // pred_fallthru
        _
    $region6: #{stochastic_actor_forward.1} parent=1 // loop_footer
      %s21 = sadd.s32 1, %s17
    $region7: #{stochastic_actor_forward.1} parent=1 // loop_footer_branch
      %16 = sbr.rel target = $region3
    $region8: #{stochastic_actor_forward.1} parent=1 // loop_exit
      _
    %1010 = vsyncpa [#allocation4], 1
    %s1011 = scalar_lea.sflag [#allocation4], 1
    %1012 = vsyncpa %s1011, 1
    %1013 = vsyncpa [#allocation6], 1
    %1014 = vsyncpa [#allocation9], 1

</llo_original>
